<compile_context>
chip_gen: v5e
topology: v5e:2x2
jax: 0.10.0
libtpu: 0.0.40
codegen_flags: <defaults>
</compile_context>

<pallas_src>
import functools

import jax
import jax.numpy as jnp
from jax import lax
from jax.experimental import pallas as pl
from jax.experimental.pallas import tpu as pltpu


def _round_up(x, m):
    return (x + m - 1) // m * m


# ----------------------------- Pallas kernel -------------------------------

def _char_decoder_kernel(ids_ref, emb_ref, wih_ref, whh_ref, b_ref,
                         wproj_ref, bproj_ref, h0_ref, c0_ref,
                         s_ref, hn_ref, cn_ref,
                         gx_scr, hs_scr):
    """Whole CharDecoder forward in one invocation.

    ids_ref   : (L*Bp, 1)   int32 character ids (time-major rows, batch padded)
    emb_ref   : (Vp, Ep)    embedding table, vocab rows padded to 128, E padded to 64
    wih_ref   : (Ep, 4H)    W_ih^T, gate order i,f,g,o along lanes, E rows zero-padded
    whh_ref   : (H, 4H)     W_hh^T
    b_ref     : (1, 4H)     b_ih + b_hh
    wproj_ref : (H, Vp)     output projection, vocab zero-padded to 128 lanes
    bproj_ref : (1, Vp)
    h0/c0     : (Bp, H)
    s_ref     : (L*Bp, Vp)  scores (lane-dense store)
    hn/cn     : (Bp, H)
    gx_scr    : (L*Bp, 4H)  hoisted fused-gate input projections (VMEM scratch)
    hs_scr    : (L*Bp, H)   per-step hidden states (VMEM scratch)
    """
    Bp, H = h0_ref.shape
    LBp = gx_scr.shape[0]
    L = LBp // Bp
    Vp = emb_ref.shape[0]

    # ---- in-kernel embedding gather as a one-hot MXU matmul (no dynamic indexing)
    lane_ids = lax.broadcasted_iota(jnp.int32, (LBp, Vp), 1)
    onehot = (lane_ids == ids_ref[...]).astype(jnp.float32)            # (L*Bp, Vp)
    x = jnp.dot(onehot, emb_ref[...],
                preferred_element_type=jnp.float32)                    # (L*Bp, Ep)

    # ---- hoisted, gate-fused input projection (bias folded in): one 128-lane matmul
    gx_scr[...] = (jnp.dot(x, wih_ref[...],
                           preferred_element_type=jnp.float32)
                   + b_ref[...])

    # recurrent weights loaded once (hoisted out of the serial loop)
    whh = whh_ref[...]                                                 # (H, 4H)

    def step(t, carry):
        h, c = carry
        base = pl.multiple_of(t * Bp, Bp)
        # one lane-dense MXU op per step for all four gates
        pre = gx_scr[pl.ds(base, Bp), :] + jnp.dot(
            h, whh, preferred_element_type=jnp.float32)                # (Bp, 4H)
        # 2 wide EUP passes per step: sigmoid via tanh identity + tanh for g gate
        sig_all = 0.5 * (jnp.tanh(0.5 * pre) + 1.0)
        tanh_all = jnp.tanh(pre)
        i_t = sig_all[:, 0 * H:1 * H]
        f_t = sig_all[:, 1 * H:2 * H]
        g_t = tanh_all[:, 2 * H:3 * H]
        o_t = sig_all[:, 3 * H:4 * H]
        c_new = f_t * c + i_t * g_t
        h_new = o_t * jnp.tanh(c_new)
        hs_scr[pl.ds(base, Bp), :] = h_new
        return h_new, c_new

    h_n, c_n = lax.fori_loop(0, L, step, (h0_ref[...], c0_ref[...]), unroll=True)

    hn_ref[...] = h_n
    cn_ref[...] = c_n

    # ---- single batched, lane-dense output projection over all L*Bp rows
    s_ref[...] = (jnp.dot(hs_scr[...], wproj_ref[...],
                          preferred_element_type=jnp.float32)
                  + bproj_ref[...])


# ------------------------------- JAX wrapper --------------------------------

def char_decoder_forward(input_ids, params, dec_hidden=None):
    """Pallas implementation of CharDecoder.forward.

    input_ids : (L, B) int32
    returns   : s_t (L, B, V) float32, (h_n, c_n) each (1, B, H) float32
    """
    L, B = input_ids.shape
    H = params["w_hh_t"].shape[0]
    V = params["vocab_size"]
    Vp = params["w_proj_t_pad"].shape[1]
    Bp = _round_up(B, 8)                         # sublane-dense batch

    ids = input_ids.astype(jnp.int32)
    if Bp != B:
        ids = jnp.pad(ids, ((0, 0), (0, Bp - B)))        # pad rows use char id 0
    ids2d = ids.reshape(L * Bp, 1)

    if dec_hidden is None:
        h0 = jnp.zeros((Bp, H), jnp.float32)
        c0 = jnp.zeros((Bp, H), jnp.float32)
    else:
        h0 = dec_hidden[0].reshape(B, H).astype(jnp.float32)
        c0 = dec_hidden[1].reshape(B, H).astype(jnp.float32)
        if Bp != B:
            h0 = jnp.pad(h0, ((0, Bp - B), (0, 0)))
            c0 = jnp.pad(c0, ((0, Bp - B), (0, 0)))

    vmem = pl.BlockSpec(memory_space=pltpu.MemorySpace.VMEM)

    s2d, h_n, c_n = pl.pallas_call(
        _char_decoder_kernel,
        out_shape=(
            jax.ShapeDtypeStruct((L * Bp, Vp), jnp.float32),
            jax.ShapeDtypeStruct((Bp, H), jnp.float32),
            jax.ShapeDtypeStruct((Bp, H), jnp.float32),
        ),
        in_specs=[vmem] * 9,
        out_specs=(vmem, vmem, vmem),
        scratch_shapes=[
            pltpu.VMEM((L * Bp, 4 * H), jnp.float32),   # fused gate pre-acts from x
            pltpu.VMEM((L * Bp, H), jnp.float32),       # h_t history
        ],
    )(ids2d, params["emb_pad"], params["w_ih_t_pad"], params["w_hh_t"],
      params["b_gates"], params["w_proj_t_pad"], params["b_proj_pad"], h0, c0)

    s_t = s2d.reshape(L, Bp, Vp)[:, :B, :V]
    h_n = h_n[:B].reshape(1, B, H)
    c_n = c_n[:B].reshape(1, B, H)
    return s_t, (h_n, c_n)


# --------------------------- pure-JAX reference -----------------------------

def char_decoder_forward_ref(input_ids, params, dec_hidden=None):
    L, B = input_ids.shape
    H = params["w_hh_t"].shape[0]
    x = jnp.take(params["emb"], input_ids, axis=0)
    if dec_hidden is None:
        h0 = jnp.zeros((B, H), jnp.float32)
        c0 = jnp.zeros((B, H), jnp.float32)
    else:
        h0, c0 = dec_hidden[0].reshape(B, H), dec_hidden[1].reshape(B, H)

    def step(carry, x_t):
        h, c = carry
        gates = x_t @ params["w_ih_t"] + h @ params["w_hh_t"] + params["b_gates"][0]
        i = jax.nn.sigmoid(gates[:, 0 * H:1 * H])
        f = jax.nn.sigmoid(gates[:, 1 * H:2 * H])
        g = jnp.tanh(gates[:, 2 * H:3 * H])
        o = jax.nn.sigmoid(gates[:, 3 * H:4 * H])
        c_new = f * c + i * g
        h_new = o * jnp.tanh(c_new)
        return (h_new, c_new), h_new

    (h_n, c_n), hs = lax.scan(step, (h0, c0), x)
    s = hs @ params["w_proj_t"] + params["b_proj"][0]
    return s, (h_n[None], c_n[None])


# ------------------------------ parameter init ------------------------------

def init_params(key, vocab_size, char_emb, hidden, char_pad=0):
    ks = jax.random.split(key, 6)
    bound = 1.0 / jnp.sqrt(hidden)
    u = lambda k, shape: jax.random.uniform(k, shape, jnp.float32, -bound, bound)

    emb = jax.random.normal(ks[0], (vocab_size, char_emb), jnp.float32)
    emb = emb.at[char_pad].set(0.0)                       # padding_idx row = 0

    w_ih = u(ks[1], (4 * hidden, char_emb))               # torch layout (4H, E), gates i,f,g,o
    w_hh = u(ks[2], (4 * hidden, hidden))                 # (4H, H)
    b_ih = u(ks[3], (4 * hidden,))
    b_hh = u(ks[4], (4 * hidden,))
    w_proj = u(ks[5], (vocab_size, hidden))               # (V, H)
    b_proj = jnp.zeros((vocab_size,), jnp.float32)

    w_ih_t = w_ih.T                                       # (E, 4H)  fused gate lanes
    w_hh_t = w_hh.T                                       # (H, 4H)
    b_gates = (b_ih + b_hh)[None, :]                      # (1, 4H)
    w_proj_t = w_proj.T                                   # (H, V)

    e_pad = _round_up(char_emb, 64)                       # aligned contraction dim
    v_pad = _round_up(vocab_size, 128)                    # lane-dense scores / one-hot width

    return {
        "vocab_size": vocab_size,
        "emb": emb,
        # plain layout (reference path)
        "w_ih_t": w_ih_t,
        "w_hh_t": w_hh_t,
        "b_gates": b_gates,
        "w_proj_t": w_proj_t,
        "b_proj": b_proj[None, :],
        # kernel layout: fused (·, 4H) gate weights, E padded to 64, vocab padded to 128
        "emb_pad": jnp.pad(emb, ((0, v_pad - vocab_size), (0, e_pad - char_emb))),
        "w_ih_t_pad": jnp.pad(w_ih_t, ((0, e_pad - char_emb), (0, 0))),
        "w_proj_t_pad": jnp.pad(w_proj_t, ((0, 0), (0, v_pad - vocab_size))),
        "b_proj_pad": jnp.pad(b_proj, (0, v_pad - vocab_size))[None, :],
    }


# ----------------------------------- main -----------------------------------

if __name__ == "__main__":
    HIDDEN = 32
    CHAR_EMB = 50
    VOCAB = 30
    LENGTH = 8
    BATCH = 4

    key = jax.random.PRNGKey(0)
    k_param, k_ids, k_h, k_c = jax.random.split(key, 4)

    params = init_params(k_param, VOCAB, CHAR_EMB, HIDDEN, char_pad=0)
    input_ids = jax.random.randint(k_ids, (LENGTH, BATCH), 0, VOCAB, jnp.int32)
    dec_hidden = (
        jax.random.normal(k_h, (1, BATCH, HIDDEN), jnp.float32),
        jax.random.normal(k_c, (1, BATCH, HIDDEN), jnp.float32),
    )

    fwd = jax.jit(functools.partial(char_decoder_forward, params=params))
    s_t, (h_n, c_n) = fwd(input_ids, dec_hidden=dec_hidden)
    jax.block_until_ready((s_t, h_n, c_n))

    # correctness check against pure-JAX reference
    s_ref, (h_ref, c_ref) = char_decoder_forward_ref(input_ids, params, dec_hidden)
    assert s_t.shape == (LENGTH, BATCH, VOCAB)
    assert h_n.shape == (1, BATCH, HIDDEN) and c_n.shape == (1, BATCH, HIDDEN)
    assert jnp.allclose(s_t, s_ref, atol=1e-4, rtol=1e-4)
    assert jnp.allclose(h_n, h_ref, atol=1e-4, rtol=1e-4)
    assert jnp.allclose(c_n, c_ref, atol=1e-4, rtol=1e-4)

    print("KERNEL_OK")
</pallas_src>

<mosaic_0001>
module attributes {stable_mosaic.version = 11 : i64} {
  func.func @_char_decoder_kernel(%arg0: memref<64x1xi32, #tpu.memory_space<vmem>>, %arg1: memref<128x64xf32, #tpu.memory_space<vmem>>, %arg2: memref<64x128xf32, #tpu.memory_space<vmem>>, %arg3: memref<32x128xf32, #tpu.memory_space<vmem>>, %arg4: memref<1x128xf32, #tpu.memory_space<vmem>>, %arg5: memref<32x128xf32, #tpu.memory_space<vmem>>, %arg6: memref<1x128xf32, #tpu.memory_space<vmem>>, %arg7: memref<8x32xf32, #tpu.memory_space<vmem>>, %arg8: memref<8x32xf32, #tpu.memory_space<vmem>>, %arg9: memref<64x128xf32, #tpu.memory_space<vmem>>, %arg10: memref<8x32xf32, #tpu.memory_space<vmem>>, %arg11: memref<8x32xf32, #tpu.memory_space<vmem>>, %arg12: memref<64x128xf32, #tpu.memory_space<vmem>>, %arg13: memref<64x32xf32, #tpu.memory_space<vmem>>) attributes {dimension_semantics = [], scalar_prefetch = 0 : i64, scratch_operands = 2 : i64, tpu.core_type = #tpu.core_type<tc>} {
    %0 = tpu.iota {dimensions = array<i32: 1>} : vector<64x128xi32>
    %c0 = arith.constant 0 : index
    %c0_0 = arith.constant 0 : index
    %1 = vector.load %arg0[%c0, %c0_0] : memref<64x1xi32, #tpu.memory_space<vmem>>, vector<64x1xi32>
    %2 = vector.broadcast %1 : vector<64x1xi32> to vector<64x128xi32>
    %3 = arith.cmpi eq, %0, %2 : vector<64x128xi32>
    %4 = arith.extui %3 : vector<64x128xi1> to vector<64x128xi32>
    %5 = arith.sitofp %4 : vector<64x128xi32> to vector<64x128xf32>
    %c0_1 = arith.constant 0 : index
    %c0_2 = arith.constant 0 : index
    %6 = vector.load %arg1[%c0_1, %c0_2] : memref<128x64xf32, #tpu.memory_space<vmem>>, vector<128x64xf32>
    %cst = arith.constant dense<0.000000e+00> : vector<64x64xf32>
    %7 = tpu.matmul %5, %6, %cst {dimension_numbers = #tpu.dot_dimension_numbers<[1], [0], [0], [1], [0, 0, 1, 1], [], []>} : vector<64x128xf32>, vector<128x64xf32>, vector<64x64xf32> -> vector<64x64xf32>
    %c0_3 = arith.constant 0 : index
    %c0_4 = arith.constant 0 : index
    %8 = vector.load %arg2[%c0_3, %c0_4] : memref<64x128xf32, #tpu.memory_space<vmem>>, vector<64x128xf32>
    %cst_5 = arith.constant dense<0.000000e+00> : vector<64x128xf32>
    %9 = tpu.matmul %7, %8, %cst_5 {dimension_numbers = #tpu.dot_dimension_numbers<[1], [0], [0], [1], [0, 0, 1, 1], [], []>} : vector<64x64xf32>, vector<64x128xf32>, vector<64x128xf32> -> vector<64x128xf32>
    %c0_6 = arith.constant 0 : index
    %c0_7 = arith.constant 0 : index
    %10 = vector.load %arg4[%c0_6, %c0_7] : memref<1x128xf32, #tpu.memory_space<vmem>>, vector<1x128xf32>
    %11 = vector.broadcast %10 : vector<1x128xf32> to vector<64x128xf32>
    %12 = arith.addf %9, %11 : vector<64x128xf32>
    %c0_8 = arith.constant 0 : index
    %c0_9 = arith.constant 0 : index
    %13 = vector.load %arg12[%c0_8, %c0_9] : memref<64x128xf32, #tpu.memory_space<vmem>>, vector<64x128xf32>
    tpu.vector_store %arg12[%c0_8, %c0_9], %12 {strides = array<i32>} : memref<64x128xf32, #tpu.memory_space<vmem>>, vector<64x128xf32>,
    %c0_10 = arith.constant 0 : index
    %c0_11 = arith.constant 0 : index
    %14 = vector.load %arg3[%c0_10, %c0_11] : memref<32x128xf32, #tpu.memory_space<vmem>>, vector<32x128xf32>
    %c0_12 = arith.constant 0 : index
    %c0_13 = arith.constant 0 : index
    %15 = vector.load %arg7[%c0_12, %c0_13] : memref<8x32xf32, #tpu.memory_space<vmem>>, vector<8x32xf32>
    %c0_14 = arith.constant 0 : index
    %c0_15 = arith.constant 0 : index
    %16 = vector.load %arg8[%c0_14, %c0_15] : memref<8x32xf32, #tpu.memory_space<vmem>>, vector<8x32xf32>
    %c0_i32 = arith.constant 0 : i32
    %c8_i32 = arith.constant 8 : i32
    %17 = arith.muli %c0_i32, %c8_i32 : i32
    %18 = tpu.assume_multiple %17, 8 : i32
    %19 = arith.index_cast %18 : i32 to index
    %c0_16 = arith.constant 0 : index
    %20 = vector.load %arg12[%19, %c0_16] : memref<64x128xf32, #tpu.memory_space<vmem>>, vector<8x128xf32>
    %cst_17 = arith.constant dense<0.000000e+00> : vector<8x128xf32>
    %21 = tpu.matmul %15, %14, %cst_17 {dimension_numbers = #tpu.dot_dimension_numbers<[1], [0], [0], [1], [0, 0, 1, 1], [], []>} : vector<8x32xf32>, vector<32x128xf32>, vector<8x128xf32> -> vector<8x128xf32>
    %22 = arith.addf %20, %21 : vector<8x128xf32>
    %cst_18 = arith.constant 5.000000e-01 : f32
    %23 = vector.broadcast %cst_18 : f32 to vector<8x128xf32>
    %24 = arith.mulf %23, %22 : vector<8x128xf32>
    %25 = math.tanh %24 : vector<8x128xf32>
    %cst_19 = arith.constant 1.000000e+00 : f32
    %26 = vector.broadcast %cst_19 : f32 to vector<8x128xf32>
    %27 = arith.addf %25, %26 : vector<8x128xf32>
    %cst_20 = arith.constant 5.000000e-01 : f32
    %28 = vector.broadcast %cst_20 : f32 to vector<8x128xf32>
    %29 = arith.mulf %28, %27 : vector<8x128xf32>
    %30 = math.tanh %22 : vector<8x128xf32>
    %31 = vector.extract_strided_slice %29 {offsets = [0, 0], sizes = [8, 32], strides = [1, 1]} : vector<8x128xf32> to vector<8x32xf32>
    %32 = vector.extract_strided_slice %29 {offsets = [0, 32], sizes = [8, 32], strides = [1, 1]} : vector<8x128xf32> to vector<8x32xf32>
    %33 = vector.extract_strided_slice %30 {offsets = [0, 64], sizes = [8, 32], strides = [1, 1]} : vector<8x128xf32> to vector<8x32xf32>
    %34 = vector.extract_strided_slice %29 {offsets = [0, 96], sizes = [8, 32], strides = [1, 1]} : vector<8x128xf32> to vector<8x32xf32>
    %35 = arith.mulf %32, %16 : vector<8x32xf32>
    %36 = arith.mulf %31, %33 : vector<8x32xf32>
    %37 = arith.addf %35, %36 : vector<8x32xf32>
    %38 = math.tanh %37 : vector<8x32xf32>
    %39 = arith.mulf %34, %38 : vector<8x32xf32>
    %40 = arith.index_cast %18 : i32 to index
    %c0_21 = arith.constant 0 : index
    %41 = vector.load %arg13[%40, %c0_21] : memref<64x32xf32, #tpu.memory_space<vmem>>, vector<8x32xf32>
    tpu.vector_store %arg13[%40, %c0_21], %39 {strides = array<i32>} : memref<64x32xf32, #tpu.memory_space<vmem>>, vector<8x32xf32>,
    %c1_i32 = arith.constant 1 : i32
    %c8_i32_22 = arith.constant 8 : i32
    %42 = arith.muli %c1_i32, %c8_i32_22 : i32
    %43 = tpu.assume_multiple %42, 8 : i32
    %44 = arith.index_cast %43 : i32 to index
    %c0_23 = arith.constant 0 : index
    %45 = vector.load %arg12[%44, %c0_23] : memref<64x128xf32, #tpu.memory_space<vmem>>, vector<8x128xf32>
    %cst_24 = arith.constant dense<0.000000e+00> : vector<8x128xf32>
    %46 = tpu.matmul %39, %14, %cst_24 {dimension_numbers = #tpu.dot_dimension_numbers<[1], [0], [0], [1], [0, 0, 1, 1], [], []>} : vector<8x32xf32>, vector<32x128xf32>, vector<8x128xf32> -> vector<8x128xf32>
    %47 = arith.addf %45, %46 : vector<8x128xf32>
    %cst_25 = arith.constant 5.000000e-01 : f32
    %48 = vector.broadcast %cst_25 : f32 to vector<8x128xf32>
    %49 = arith.mulf %48, %47 : vector<8x128xf32>
    %50 = math.tanh %49 : vector<8x128xf32>
    %cst_26 = arith.constant 1.000000e+00 : f32
    %51 = vector.broadcast %cst_26 : f32 to vector<8x128xf32>
    %52 = arith.addf %50, %51 : vector<8x128xf32>
    %cst_27 = arith.constant 5.000000e-01 : f32
    %53 = vector.broadcast %cst_27 : f32 to vector<8x128xf32>
    %54 = arith.mulf %53, %52 : vector<8x128xf32>
    %55 = math.tanh %47 : vector<8x128xf32>
    %56 = vector.extract_strided_slice %54 {offsets = [0, 0], sizes = [8, 32], strides = [1, 1]} : vector<8x128xf32> to vector<8x32xf32>
    %57 = vector.extract_strided_slice %54 {offsets = [0, 32], sizes = [8, 32], strides = [1, 1]} : vector<8x128xf32> to vector<8x32xf32>
    %58 = vector.extract_strided_slice %55 {offsets = [0, 64], sizes = [8, 32], strides = [1, 1]} : vector<8x128xf32> to vector<8x32xf32>
    %59 = vector.extract_strided_slice %54 {offsets = [0, 96], sizes = [8, 32], strides = [1, 1]} : vector<8x128xf32> to vector<8x32xf32>
    %60 = arith.mulf %57, %37 : vector<8x32xf32>
    %61 = arith.mulf %56, %58 : vector<8x32xf32>
    %62 = arith.addf %60, %61 : vector<8x32xf32>
    %63 = math.tanh %62 : vector<8x32xf32>
    %64 = arith.mulf %59, %63 : vector<8x32xf32>
    %65 = arith.index_cast %43 : i32 to index
    %c0_28 = arith.constant 0 : index
    %66 = vector.load %arg13[%65, %c0_28] : memref<64x32xf32, #tpu.memory_space<vmem>>, vector<8x32xf32>
    tpu.vector_store %arg13[%65, %c0_28], %64 {strides = array<i32>} : memref<64x32xf32, #tpu.memory_space<vmem>>, vector<8x32xf32>,
    %c2_i32 = arith.constant 2 : i32
    %c8_i32_29 = arith.constant 8 : i32
    %67 = arith.muli %c2_i32, %c8_i32_29 : i32
    %68 = tpu.assume_multiple %67, 8 : i32
    %69 = arith.index_cast %68 : i32 to index
    %c0_30 = arith.constant 0 : index
    %70 = vector.load %arg12[%69, %c0_30] : memref<64x128xf32, #tpu.memory_space<vmem>>, vector<8x128xf32>
    %cst_31 = arith.constant dense<0.000000e+00> : vector<8x128xf32>
    %71 = tpu.matmul %64, %14, %cst_31 {dimension_numbers = #tpu.dot_dimension_numbers<[1], [0], [0], [1], [0, 0, 1, 1], [], []>} : vector<8x32xf32>, vector<32x128xf32>, vector<8x128xf32> -> vector<8x128xf32>
    %72 = arith.addf %70, %71 : vector<8x128xf32>
    %cst_32 = arith.constant 5.000000e-01 : f32
    %73 = vector.broadcast %cst_32 : f32 to vector<8x128xf32>
    %74 = arith.mulf %73, %72 : vector<8x128xf32>
    %75 = math.tanh %74 : vector<8x128xf32>
    %cst_33 = arith.constant 1.000000e+00 : f32
    %76 = vector.broadcast %cst_33 : f32 to vector<8x128xf32>
    %77 = arith.addf %75, %76 : vector<8x128xf32>
    %cst_34 = arith.constant 5.000000e-01 : f32
    %78 = vector.broadcast %cst_34 : f32 to vector<8x128xf32>
    %79 = arith.mulf %78, %77 : vector<8x128xf32>
    %80 = math.tanh %72 : vector<8x128xf32>
    %81 = vector.extract_strided_slice %79 {offsets = [0, 0], sizes = [8, 32], strides = [1, 1]} : vector<8x128xf32> to vector<8x32xf32>
    %82 = vector.extract_strided_slice %79 {offsets = [0, 32], sizes = [8, 32], strides = [1, 1]} : vector<8x128xf32> to vector<8x32xf32>
    %83 = vector.extract_strided_slice %80 {offsets = [0, 64], sizes = [8, 32], strides = [1, 1]} : vector<8x128xf32> to vector<8x32xf32>
    %84 = vector.extract_strided_slice %79 {offsets = [0, 96], sizes = [8, 32], strides = [1, 1]} : vector<8x128xf32> to vector<8x32xf32>
    %85 = arith.mulf %82, %62 : vector<8x32xf32>
    %86 = arith.mulf %81, %83 : vector<8x32xf32>
    %87 = arith.addf %85, %86 : vector<8x32xf32>
    %88 = math.tanh %87 : vector<8x32xf32>
    %89 = arith.mulf %84, %88 : vector<8x32xf32>
    %90 = arith.index_cast %68 : i32 to index
    %c0_35 = arith.constant 0 : index
    %91 = vector.load %arg13[%90, %c0_35] : memref<64x32xf32, #tpu.memory_space<vmem>>, vector<8x32xf32>
    tpu.vector_store %arg13[%90, %c0_35], %89 {strides = array<i32>} : memref<64x32xf32, #tpu.memory_space<vmem>>, vector<8x32xf32>,
    %c3_i32 = arith.constant 3 : i32
    %c8_i32_36 = arith.constant 8 : i32
    %92 = arith.muli %c3_i32, %c8_i32_36 : i32
    %93 = tpu.assume_multiple %92, 8 : i32
    %94 = arith.index_cast %93 : i32 to index
    %c0_37 = arith.constant 0 : index
    %95 = vector.load %arg12[%94, %c0_37] : memref<64x128xf32, #tpu.memory_space<vmem>>, vector<8x128xf32>
    %cst_38 = arith.constant dense<0.000000e+00> : vector<8x128xf32>
    %96 = tpu.matmul %89, %14, %cst_38 {dimension_numbers = #tpu.dot_dimension_numbers<[1], [0], [0], [1], [0, 0, 1, 1], [], []>} : vector<8x32xf32>, vector<32x128xf32>, vector<8x128xf32> -> vector<8x128xf32>
    %97 = arith.addf %95, %96 : vector<8x128xf32>
    %cst_39 = arith.constant 5.000000e-01 : f32
    %98 = vector.broadcast %cst_39 : f32 to vector<8x128xf32>
    %99 = arith.mulf %98, %97 : vector<8x128xf32>
    %100 = math.tanh %99 : vector<8x128xf32>
    %cst_40 = arith.constant 1.000000e+00 : f32
    %101 = vector.broadcast %cst_40 : f32 to vector<8x128xf32>
    %102 = arith.addf %100, %101 : vector<8x128xf32>
    %cst_41 = arith.constant 5.000000e-01 : f32
    %103 = vector.broadcast %cst_41 : f32 to vector<8x128xf32>
    %104 = arith.mulf %103, %102 : vector<8x128xf32>
    %105 = math.tanh %97 : vector<8x128xf32>
    %106 = vector.extract_strided_slice %104 {offsets = [0, 0], sizes = [8, 32], strides = [1, 1]} : vector<8x128xf32> to vector<8x32xf32>
    %107 = vector.extract_strided_slice %104 {offsets = [0, 32], sizes = [8, 32], strides = [1, 1]} : vector<8x128xf32> to vector<8x32xf32>
    %108 = vector.extract_strided_slice %105 {offsets = [0, 64], sizes = [8, 32], strides = [1, 1]} : vector<8x128xf32> to vector<8x32xf32>
    %109 = vector.extract_strided_slice %104 {offsets = [0, 96], sizes = [8, 32], strides = [1, 1]} : vector<8x128xf32> to vector<8x32xf32>
    %110 = arith.mulf %107, %87 : vector<8x32xf32>
    %111 = arith.mulf %106, %108 : vector<8x32xf32>
    %112 = arith.addf %110, %111 : vector<8x32xf32>
    %113 = math.tanh %112 : vector<8x32xf32>
    %114 = arith.mulf %109, %113 : vector<8x32xf32>
    %115 = arith.index_cast %93 : i32 to index
    %c0_42 = arith.constant 0 : index
    %116 = vector.load %arg13[%115, %c0_42] : memref<64x32xf32, #tpu.memory_space<vmem>>, vector<8x32xf32>
    tpu.vector_store %arg13[%115, %c0_42], %114 {strides = array<i32>} : memref<64x32xf32, #tpu.memory_space<vmem>>, vector<8x32xf32>,
    %c4_i32 = arith.constant 4 : i32
    %c8_i32_43 = arith.constant 8 : i32
    %117 = arith.muli %c4_i32, %c8_i32_43 : i32
    %118 = tpu.assume_multiple %117, 8 : i32
    %119 = arith.index_cast %118 : i32 to index
    %c0_44 = arith.constant 0 : index
    %120 = vector.load %arg12[%119, %c0_44] : memref<64x128xf32, #tpu.memory_space<vmem>>, vector<8x128xf32>
    %cst_45 = arith.constant dense<0.000000e+00> : vector<8x128xf32>
    %121 = tpu.matmul %114, %14, %cst_45 {dimension_numbers = #tpu.dot_dimension_numbers<[1], [0], [0], [1], [0, 0, 1, 1], [], []>} : vector<8x32xf32>, vector<32x128xf32>, vector<8x128xf32> -> vector<8x128xf32>
    %122 = arith.addf %120, %121 : vector<8x128xf32>
    %cst_46 = arith.constant 5.000000e-01 : f32
    %123 = vector.broadcast %cst_46 : f32 to vector<8x128xf32>
    %124 = arith.mulf %123, %122 : vector<8x128xf32>
    %125 = math.tanh %124 : vector<8x128xf32>
    %cst_47 = arith.constant 1.000000e+00 : f32
    %126 = vector.broadcast %cst_47 : f32 to vector<8x128xf32>
    %127 = arith.addf %125, %126 : vector<8x128xf32>
    %cst_48 = arith.constant 5.000000e-01 : f32
    %128 = vector.broadcast %cst_48 : f32 to vector<8x128xf32>
    %129 = arith.mulf %128, %127 : vector<8x128xf32>
    %130 = math.tanh %122 : vector<8x128xf32>
    %131 = vector.extract_strided_slice %129 {offsets = [0, 0], sizes = [8, 32], strides = [1, 1]} : vector<8x128xf32> to vector<8x32xf32>
    %132 = vector.extract_strided_slice %129 {offsets = [0, 32], sizes = [8, 32], strides = [1, 1]} : vector<8x128xf32> to vector<8x32xf32>
    %133 = vector.extract_strided_slice %130 {offsets = [0, 64], sizes = [8, 32], strides = [1, 1]} : vector<8x128xf32> to vector<8x32xf32>
    %134 = vector.extract_strided_slice %129 {offsets = [0, 96], sizes = [8, 32], strides = [1, 1]} : vector<8x128xf32> to vector<8x32xf32>
    %135 = arith.mulf %132, %112 : vector<8x32xf32>
    %136 = arith.mulf %131, %133 : vector<8x32xf32>
    %137 = arith.addf %135, %136 : vector<8x32xf32>
    %138 = math.tanh %137 : vector<8x32xf32>
    %139 = arith.mulf %134, %138 : vector<8x32xf32>
    %140 = arith.index_cast %118 : i32 to index
    %c0_49 = arith.constant 0 : index
    %141 = vector.load %arg13[%140, %c0_49] : memref<64x32xf32, #tpu.memory_space<vmem>>, vector<8x32xf32>
    tpu.vector_store %arg13[%140, %c0_49], %139 {strides = array<i32>} : memref<64x32xf32, #tpu.memory_space<vmem>>, vector<8x32xf32>,
    %c5_i32 = arith.constant 5 : i32
    %c8_i32_50 = arith.constant 8 : i32
    %142 = arith.muli %c5_i32, %c8_i32_50 : i32
    %143 = tpu.assume_multiple %142, 8 : i32
    %144 = arith.index_cast %143 : i32 to index
    %c0_51 = arith.constant 0 : index
    %145 = vector.load %arg12[%144, %c0_51] : memref<64x128xf32, #tpu.memory_space<vmem>>, vector<8x128xf32>
    %cst_52 = arith.constant dense<0.000000e+00> : vector<8x128xf32>
    %146 = tpu.matmul %139, %14, %cst_52 {dimension_numbers = #tpu.dot_dimension_numbers<[1], [0], [0], [1], [0, 0, 1, 1], [], []>} : vector<8x32xf32>, vector<32x128xf32>, vector<8x128xf32> -> vector<8x128xf32>
    %147 = arith.addf %145, %146 : vector<8x128xf32>
    %cst_53 = arith.constant 5.000000e-01 : f32
    %148 = vector.broadcast %cst_53 : f32 to vector<8x128xf32>
    %149 = arith.mulf %148, %147 : vector<8x128xf32>
    %150 = math.tanh %149 : vector<8x128xf32>
    %cst_54 = arith.constant 1.000000e+00 : f32
    %151 = vector.broadcast %cst_54 : f32 to vector<8x128xf32>
    %152 = arith.addf %150, %151 : vector<8x128xf32>
    %cst_55 = arith.constant 5.000000e-01 : f32
    %153 = vector.broadcast %cst_55 : f32 to vector<8x128xf32>
    %154 = arith.mulf %153, %152 : vector<8x128xf32>
    %155 = math.tanh %147 : vector<8x128xf32>
    %156 = vector.extract_strided_slice %154 {offsets = [0, 0], sizes = [8, 32], strides = [1, 1]} : vector<8x128xf32> to vector<8x32xf32>
    %157 = vector.extract_strided_slice %154 {offsets = [0, 32], sizes = [8, 32], strides = [1, 1]} : vector<8x128xf32> to vector<8x32xf32>
    %158 = vector.extract_strided_slice %155 {offsets = [0, 64], sizes = [8, 32], strides = [1, 1]} : vector<8x128xf32> to vector<8x32xf32>
    %159 = vector.extract_strided_slice %154 {offsets = [0, 96], sizes = [8, 32], strides = [1, 1]} : vector<8x128xf32> to vector<8x32xf32>
    %160 = arith.mulf %157, %137 : vector<8x32xf32>
    %161 = arith.mulf %156, %158 : vector<8x32xf32>
    %162 = arith.addf %160, %161 : vector<8x32xf32>
    %163 = math.tanh %162 : vector<8x32xf32>
    %164 = arith.mulf %159, %163 : vector<8x32xf32>
    %165 = arith.index_cast %143 : i32 to index
    %c0_56 = arith.constant 0 : index
    %166 = vector.load %arg13[%165, %c0_56] : memref<64x32xf32, #tpu.memory_space<vmem>>, vector<8x32xf32>
    tpu.vector_store %arg13[%165, %c0_56], %164 {strides = array<i32>} : memref<64x32xf32, #tpu.memory_space<vmem>>, vector<8x32xf32>,
    %c6_i32 = arith.constant 6 : i32
    %c8_i32_57 = arith.constant 8 : i32
    %167 = arith.muli %c6_i32, %c8_i32_57 : i32
    %168 = tpu.assume_multiple %167, 8 : i32
    %169 = arith.index_cast %168 : i32 to index
    %c0_58 = arith.constant 0 : index
    %170 = vector.load %arg12[%169, %c0_58] : memref<64x128xf32, #tpu.memory_space<vmem>>, vector<8x128xf32>
    %cst_59 = arith.constant dense<0.000000e+00> : vector<8x128xf32>
    %171 = tpu.matmul %164, %14, %cst_59 {dimension_numbers = #tpu.dot_dimension_numbers<[1], [0], [0], [1], [0, 0, 1, 1], [], []>} : vector<8x32xf32>, vector<32x128xf32>, vector<8x128xf32> -> vector<8x128xf32>
    %172 = arith.addf %170, %171 : vector<8x128xf32>
    %cst_60 = arith.constant 5.000000e-01 : f32
    %173 = vector.broadcast %cst_60 : f32 to vector<8x128xf32>
    %174 = arith.mulf %173, %172 : vector<8x128xf32>
    %175 = math.tanh %174 : vector<8x128xf32>
    %cst_61 = arith.constant 1.000000e+00 : f32
    %176 = vector.broadcast %cst_61 : f32 to vector<8x128xf32>
    %177 = arith.addf %175, %176 : vector<8x128xf32>
    %cst_62 = arith.constant 5.000000e-01 : f32
    %178 = vector.broadcast %cst_62 : f32 to vector<8x128xf32>
    %179 = arith.mulf %178, %177 : vector<8x128xf32>
    %180 = math.tanh %172 : vector<8x128xf32>
    %181 = vector.extract_strided_slice %179 {offsets = [0, 0], sizes = [8, 32], strides = [1, 1]} : vector<8x128xf32> to vector<8x32xf32>
    %182 = vector.extract_strided_slice %179 {offsets = [0, 32], sizes = [8, 32], strides = [1, 1]} : vector<8x128xf32> to vector<8x32xf32>
    %183 = vector.extract_strided_slice %180 {offsets = [0, 64], sizes = [8, 32], strides = [1, 1]} : vector<8x128xf32> to vector<8x32xf32>
    %184 = vector.extract_strided_slice %179 {offsets = [0, 96], sizes = [8, 32], strides = [1, 1]} : vector<8x128xf32> to vector<8x32xf32>
    %185 = arith.mulf %182, %162 : vector<8x32xf32>
    %186 = arith.mulf %181, %183 : vector<8x32xf32>
    %187 = arith.addf %185, %186 : vector<8x32xf32>
    %188 = math.tanh %187 : vector<8x32xf32>
    %189 = arith.mulf %184, %188 : vector<8x32xf32>
    %190 = arith.index_cast %168 : i32 to index
    %c0_63 = arith.constant 0 : index
    %191 = vector.load %arg13[%190, %c0_63] : memref<64x32xf32, #tpu.memory_space<vmem>>, vector<8x32xf32>
    tpu.vector_store %arg13[%190, %c0_63], %189 {strides = array<i32>} : memref<64x32xf32, #tpu.memory_space<vmem>>, vector<8x32xf32>,
    %c7_i32 = arith.constant 7 : i32
    %c8_i32_64 = arith.constant 8 : i32
    %192 = arith.muli %c7_i32, %c8_i32_64 : i32
    %193 = tpu.assume_multiple %192, 8 : i32
    %194 = arith.index_cast %193 : i32 to index
    %c0_65 = arith.constant 0 : index
    %195 = vector.load %arg12[%194, %c0_65] : memref<64x128xf32, #tpu.memory_space<vmem>>, vector<8x128xf32>
    %cst_66 = arith.constant dense<0.000000e+00> : vector<8x128xf32>
    %196 = tpu.matmul %189, %14, %cst_66 {dimension_numbers = #tpu.dot_dimension_numbers<[1], [0], [0], [1], [0, 0, 1, 1], [], []>} : vector<8x32xf32>, vector<32x128xf32>, vector<8x128xf32> -> vector<8x128xf32>
    %197 = arith.addf %195, %196 : vector<8x128xf32>
    %cst_67 = arith.constant 5.000000e-01 : f32
    %198 = vector.broadcast %cst_67 : f32 to vector<8x128xf32>
    %199 = arith.mulf %198, %197 : vector<8x128xf32>
    %200 = math.tanh %199 : vector<8x128xf32>
    %cst_68 = arith.constant 1.000000e+00 : f32
    %201 = vector.broadcast %cst_68 : f32 to vector<8x128xf32>
    %202 = arith.addf %200, %201 : vector<8x128xf32>
    %cst_69 = arith.constant 5.000000e-01 : f32
    %203 = vector.broadcast %cst_69 : f32 to vector<8x128xf32>
    %204 = arith.mulf %203, %202 : vector<8x128xf32>
    %205 = math.tanh %197 : vector<8x128xf32>
    %206 = vector.extract_strided_slice %204 {offsets = [0, 0], sizes = [8, 32], strides = [1, 1]} : vector<8x128xf32> to vector<8x32xf32>
    %207 = vector.extract_strided_slice %204 {offsets = [0, 32], sizes = [8, 32], strides = [1, 1]} : vector<8x128xf32> to vector<8x32xf32>
    %208 = vector.extract_strided_slice %205 {offsets = [0, 64], sizes = [8, 32], strides = [1, 1]} : vector<8x128xf32> to vector<8x32xf32>
    %209 = vector.extract_strided_slice %204 {offsets = [0, 96], sizes = [8, 32], strides = [1, 1]} : vector<8x128xf32> to vector<8x32xf32>
    %210 = arith.mulf %207, %187 : vector<8x32xf32>
    %211 = arith.mulf %206, %208 : vector<8x32xf32>
    %212 = arith.addf %210, %211 : vector<8x32xf32>
    %213 = math.tanh %212 : vector<8x32xf32>
    %214 = arith.mulf %209, %213 : vector<8x32xf32>
    %215 = arith.index_cast %193 : i32 to index
    %c0_70 = arith.constant 0 : index
    %216 = vector.load %arg13[%215, %c0_70] : memref<64x32xf32, #tpu.memory_space<vmem>>, vector<8x32xf32>
    tpu.vector_store %arg13[%215, %c0_70], %214 {strides = array<i32>} : memref<64x32xf32, #tpu.memory_space<vmem>>, vector<8x32xf32>,
    %c8_i32_71 = arith.constant 8 : i32
    %c0_72 = arith.constant 0 : index
    %c0_73 = arith.constant 0 : index
    %217 = vector.load %arg10[%c0_72, %c0_73] : memref<8x32xf32, #tpu.memory_space<vmem>>, vector<8x32xf32>
    tpu.vector_store %arg10[%c0_72, %c0_73], %214 {strides = array<i32>} : memref<8x32xf32, #tpu.memory_space<vmem>>, vector<8x32xf32>,
    %c0_74 = arith.constant 0 : index
    %c0_75 = arith.constant 0 : index
    %218 = vector.load %arg11[%c0_74, %c0_75] : memref<8x32xf32, #tpu.memory_space<vmem>>, vector<8x32xf32>
    tpu.vector_store %arg11[%c0_74, %c0_75], %212 {strides = array<i32>} : memref<8x32xf32, #tpu.memory_space<vmem>>, vector<8x32xf32>,
    %c0_76 = arith.constant 0 : index
    %c0_77 = arith.constant 0 : index
    %219 = vector.load %arg13[%c0_76, %c0_77] : memref<64x32xf32, #tpu.memory_space<vmem>>, vector<64x32xf32>
    %c0_78 = arith.constant 0 : index
    %c0_79 = arith.constant 0 : index
    %220 = vector.load %arg5[%c0_78, %c0_79] : memref<32x128xf32, #tpu.memory_space<vmem>>, vector<32x128xf32>
    %cst_80 = arith.constant dense<0.000000e+00> : vector<64x128xf32>
    %221 = tpu.matmul %219, %220, %cst_80 {dimension_numbers = #tpu.dot_dimension_numbers<[1], [0], [0], [1], [0, 0, 1, 1], [], []>} : vector<64x32xf32>, vector<32x128xf32>, vector<64x128xf32> -> vector<64x128xf32>
    %c0_81 = arith.constant 0 : index
    %c0_82 = arith.constant 0 : index
    %222 = vector.load %arg6[%c0_81, %c0_82] : memref<1x128xf32, #tpu.memory_space<vmem>>, vector<1x128xf32>
    %223 = vector.broadcast %222 : vector<1x128xf32> to vector<64x128xf32>
    %224 = arith.addf %221, %223 : vector<64x128xf32>
    %c0_83 = arith.constant 0 : index
    %c0_84 = arith.constant 0 : index
    %225 = vector.load %arg9[%c0_83, %c0_84] : memref<64x128xf32, #tpu.memory_space<vmem>>, vector<64x128xf32>
    tpu.vector_store %arg9[%c0_83, %c0_84], %224 {strides = array<i32>} : memref<64x128xf32, #tpu.memory_space<vmem>>, vector<64x128xf32>,
    return
  }
}

</mosaic_0001>

<llo_original>
// kernel: char_decoder_forward.1
$region0: #{char_decoder_forward.1}
  #allocation0 [shape = 'u32[]', space=smem, size = 0x4, offset = 0x4, fixed_abs, tag = 'smem constant byte address 0x4 - core index']
  #allocation1 [shape = 'u32[72,128]{1,0:T(1,128)}', space=vmem, size = 0x9000, scoped, tag = 'internal scratch']
  #allocation2 [shape = 'f32[64,128]{1,0:T(8,128)}', space=vmem, size = 0x8000, scoped, tag = 'scratch operand']
  #allocation3 [shape = 'f32[64,32]{1,0:T(8,128)}', space=vmem, size = 0x8000, scoped, tag = 'scratch operand']
  %s0 = inlined_call_operand.vmem [shape: s32[64,1], index: 0, kind: input, shape index: {}]
  %s1 = inlined_call_operand.hbm [shape: f32[128,64], index: 1, kind: input, shape index: {}]
  %s2 = inlined_call_operand.vmem [shape: f32[64,128], index: 2, kind: input, shape index: {}]
  %s3 = inlined_call_operand.hbm [shape: f32[32,128], index: 3, kind: input, shape index: {}]
  %s4 = inlined_call_operand.vmem [shape: f32[1,128], index: 4, kind: input, shape index: {}]
  %s5 = inlined_call_operand.vmem [shape: f32[32,128], index: 5, kind: input, shape index: {}]
  %s6 = inlined_call_operand.vmem [shape: f32[1,128], index: 6, kind: input, shape index: {}]
  %s7 = inlined_call_operand.vmem [shape: f32[8,32], index: 7, kind: input, shape index: {}]
  %s8 = inlined_call_operand.vmem [shape: f32[8,32], index: 8, kind: input, shape index: {}]
  %s9 = inlined_call_operand.vmem [shape: f32[64,128], index: 9, kind: output, shape index: {0}]
  %s10 = inlined_call_operand.vmem [shape: f32[8,32], index: 10, kind: output, shape index: {1}]
  %s11 = inlined_call_operand.vmem [shape: f32[8,32], index: 11, kind: output, shape index: {2}]
  %12 = xla_tuple %s9, %s10, %s11
  %s13 = sld [smem:[#allocation0]]
  $region70: #{char_decoder_forward.1} parent=0
    _
  %s15 = ssub.s32 1, %s13
  %s16 = scalar_select 0, %s15, %s13
  $region1: #{char_decoder_forward.1} parent=0
    #allocation4 [shape = 'u8[65536]{0}', space=vmem, size = 0x10000, scoped, tag = 'input window, operand 1, single buffered']
    #allocation5 [shape = 's32[1]{0}', space=sflag, size = 0x4, scoped, tag = 'scoped memory for char_decoder_forward.1']
    #allocation6 [shape = 'u8[16384]{0}', space=vmem, size = 0x4000, scoped, tag = 'input window, operand 3, single buffered']
    #allocation7 [shape = 's32[1]{0}', space=sflag, size = 0x4, scoped, tag = 'scoped memory for char_decoder_forward.1']
    %17 = vsyncpa [#allocation5], 0
    %18 = vsyncpa [#allocation7], 0
    // Predicated region
    $region2: #{char_decoder_forward.1} parent=1 // pred_check
      _
    $region3: #{char_decoder_forward.1} parent=1 // pred_check_branch
      %20 = sbr.rel (0) target = $region5
    $region4: #{char_decoder_forward.1} parent=1 // pred_region
      _
    $region5: #{char_decoder_forward.1} parent=1 // pred_fallthru
      _
    // Predicated region
    $region6: #{char_decoder_forward.1} parent=1 // pred_check
      _
    $region7: #{char_decoder_forward.1} parent=1 // pred_check_branch
      %22 = sbr.rel (0) target = $region9
    $region8: #{char_decoder_forward.1} parent=1 // pred_region
      %24 = vsyncadd [#allocation5], 0
      %s25 = sshll.u32 %s1, 4
      %s26 = int_to_ptr.hbm [resolvable:$true] %s25
      %s27 = sshll.u32 [#allocation4], 4
      %s28 = int_to_ptr.vmem [resolvable:$true] %s27
      %33 = dma.hbm_to_vmem [thread:$0]  %s26, 2048, %s28, [#allocation5], 128, 128, 8
    $region9: #{char_decoder_forward.1} parent=1 // pred_fallthru
      _
    // Predicated region
    $region10: #{char_decoder_forward.1} parent=1 // pred_check
      _
    $region11: #{char_decoder_forward.1} parent=1 // pred_check_branch
      %35 = sbr.rel (0) target = $region13
    $region12: #{char_decoder_forward.1} parent=1 // pred_region
      _
    $region13: #{char_decoder_forward.1} parent=1 // pred_fallthru
      _
    // Predicated region
    $region14: #{char_decoder_forward.1} parent=1 // pred_check
      _
    $region15: #{char_decoder_forward.1} parent=1 // pred_check_branch
      %37 = sbr.rel (0) target = $region17
    $region16: #{char_decoder_forward.1} parent=1 // pred_region
      %39 = vsyncadd [#allocation7], 0
      %s40 = sshll.u32 %s3, 4
      %s41 = int_to_ptr.hbm [resolvable:$true] %s40
      %s42 = sshll.u32 [#allocation6], 4
      %s43 = int_to_ptr.vmem [resolvable:$true] %s42
      %48 = dma.hbm_to_vmem [thread:$0]  %s41, 512, %s43, [#allocation7], 128, 128, 8
    $region17: #{char_decoder_forward.1} parent=1 // pred_fallthru
      _
    // Predicated region
    $region18: #{char_decoder_forward.1} parent=1 // pred_check
      _
    $region19: #{char_decoder_forward.1} parent=1 // pred_check_branch
      %50 = sbr.rel (0) target = $region21
    $region20: #{char_decoder_forward.1} parent=1 // pred_region
      _
    $region21: #{char_decoder_forward.1} parent=1 // pred_fallthru
      _
    // Predicated region
    $region22: #{char_decoder_forward.1} parent=1 // pred_check
      _
    $region23: #{char_decoder_forward.1} parent=1 // pred_check_branch
      %52 = sbr.rel (0) target = $region25
    $region24: #{char_decoder_forward.1} parent=1 // pred_region
      _
    $region25: #{char_decoder_forward.1} parent=1 // pred_fallthru
      _
    // Predicated region
    $region26: #{char_decoder_forward.1} parent=1 // pred_check
      _
    $region27: #{char_decoder_forward.1} parent=1 // pred_check_branch
      %54 = sbr.rel (0) target = $region29
    $region28: #{char_decoder_forward.1} parent=1 // pred_region
      _
    $region29: #{char_decoder_forward.1} parent=1 // pred_fallthru
      _
    // Predicated region
    $region30: #{char_decoder_forward.1} parent=1 // pred_check
      _
    $region31: #{char_decoder_forward.1} parent=1 // pred_check_branch
      %56 = sbr.rel (0) target = $region33
    $region32: #{char_decoder_forward.1} parent=1 // pred_region
      _
    $region33: #{char_decoder_forward.1} parent=1 // pred_fallthru
      _
    // Predicated region
    $region34: #{char_decoder_forward.1} parent=1 // pred_check
      _
    $region35: #{char_decoder_forward.1} parent=1 // pred_check_branch
      %58 = sbr.rel (0) target = $region37
    $region36: #{char_decoder_forward.1} parent=1 // pred_region
      _
    $region37: #{char_decoder_forward.1} parent=1 // pred_fallthru
      _
    // Predicated region
    $region38: #{char_decoder_forward.1} parent=1 // pred_check
      _
    $region39: #{char_decoder_forward.1} parent=1 // pred_check_branch
      %60 = sbr.rel (0) target = $region41
    $region40: #{char_decoder_forward.1} parent=1 // pred_region
      %62 = dma.done [#allocation5], 2048
    $region41: #{char_decoder_forward.1} parent=1 // pred_fallthru
      _
    // Predicated region
    $region42: #{char_decoder_forward.1} parent=1 // pred_check
      _
    $region43: #{char_decoder_forward.1} parent=1 // pred_check_branch
      %64 = sbr.rel (0) target = $region45
    $region44: #{char_decoder_forward.1} parent=1 // pred_region
      %66 = dma.done [#allocation7], 512
    $region45: #{char_decoder_forward.1} parent=1 // pred_fallthru
      _
    %v67 = vlaneseq
    %v68 = vand.u32 %v67, 127
    %v69 = vld [vmem:[%s0] sm:$0xff]
    %v70 = vld [vmem:[%s0 + $0x8] sm:$0xff]
    %v71 = vld [vmem:[%s0 + $0x10] sm:$0xff]
    %v72 = vld [vmem:[%s0 + $0x18] sm:$0xff]
    %v73 = vld [vmem:[%s0 + $0x20] sm:$0xff]
    %v74 = vld [vmem:[%s0 + $0x28] sm:$0xff]
    %v75 = vld [vmem:[%s0 + $0x30] sm:$0xff]
    %v76 = vld [vmem:[%s0 + $0x38] sm:$0xff]
    %77 = vset.pattern.permute.xlu0 0
    %78 = vperm.xlu0 %77, %v69
    %v79 = vpop.permute.xlu0 %78
    %80 = vset.pattern.permute.xlu0 0
    %81 = vperm.xlu0 %80, %v70
    %v82 = vpop.permute.xlu0 %81
    %83 = vset.pattern.permute.xlu0 0
    %84 = vperm.xlu0 %83, %v71
    %v85 = vpop.permute.xlu0 %84
    %86 = vset.pattern.permute.xlu0 0
    %87 = vperm.xlu0 %86, %v72
    %v88 = vpop.permute.xlu0 %87
    %89 = vset.pattern.permute.xlu0 0
    %90 = vperm.xlu0 %89, %v73
    %v91 = vpop.permute.xlu0 %90
    %92 = vset.pattern.permute.xlu0 0
    %93 = vperm.xlu0 %92, %v74
    %v94 = vpop.permute.xlu0 %93
    %95 = vset.pattern.permute.xlu0 0
    %96 = vperm.xlu0 %95, %v75
    %v97 = vpop.permute.xlu0 %96
    %98 = vset.pattern.permute.xlu0 0
    %99 = vperm.xlu0 %98, %v76
    %v100 = vpop.permute.xlu0 %99
    %vm101 = vcmp.eq.s32.totalorder %v68, %v79
    %vm102 = vcmp.eq.s32.totalorder %v68, %v82
    %vm103 = vcmp.eq.s32.totalorder %v68, %v85
    %vm104 = vcmp.eq.s32.totalorder %v68, %v88
    %vm105 = vcmp.eq.s32.totalorder %v68, %v91
    %vm106 = vcmp.eq.s32.totalorder %v68, %v94
    %vm107 = vcmp.eq.s32.totalorder %v68, %v97
    %vm108 = vcmp.eq.s32.totalorder %v68, %v100
    %v109 = vsel %vm101, 1, 0
    %v110 = vsel %vm102, 1, 0
    %v111 = vsel %vm103, 1, 0
    %v112 = vsel %vm104, 1, 0
    %v113 = vsel %vm105, 1, 0
    %v114 = vsel %vm106, 1, 0
    %v115 = vsel %vm107, 1, 0
    %v116 = vsel %vm108, 1, 0
    %v117 = vcvt.s32.f32 %v109
    %v118 = vcvt.s32.f32 %v110
    %v119 = vcvt.s32.f32 %v111
    %v120 = vcvt.s32.f32 %v112
    %v121 = vcvt.s32.f32 %v113
    %v122 = vcvt.s32.f32 %v114
    %v123 = vcvt.s32.f32 %v115
    %v124 = vcvt.s32.f32 %v116
    %v125 = vld [vmem:[#allocation4] sm:$0xff]
    %v126 = vld [vmem:[#allocation4 + $0x8] sm:$0xff]
    %v127 = vld [vmem:[#allocation4 + $0x10] sm:$0xff]
    %v128 = vld [vmem:[#allocation4 + $0x18] sm:$0xff]
    %v129 = vld [vmem:[#allocation4 + $0x20] sm:$0xff]
    %v130 = vld [vmem:[#allocation4 + $0x28] sm:$0xff]
    %v131 = vld [vmem:[#allocation4 + $0x30] sm:$0xff]
    %v132 = vld [vmem:[#allocation4 + $0x38] sm:$0xff]
    %v133 = vld [vmem:[#allocation4 + $0x40] sm:$0xff]
    %v134 = vld [vmem:[#allocation4 + $0x48] sm:$0xff]
    %v135 = vld [vmem:[#allocation4 + $0x50] sm:$0xff]
    %v136 = vld [vmem:[#allocation4 + $0x58] sm:$0xff]
    %v137 = vld [vmem:[#allocation4 + $0x60] sm:$0xff]
    %v138 = vld [vmem:[#allocation4 + $0x68] sm:$0xff]
    %v139 = vld [vmem:[#allocation4 + $0x70] sm:$0xff]
    %v140 = vld [vmem:[#allocation4 + $0x78] sm:$0xff]
    %141 = vmatpush.msra.mxu0 %v140
    %142 = vmatpush.msra.mxu0 %v139
    %143 = vmatpush.msra.mxu0 %v138
    %144 = vmatpush.msra.mxu0 %v137
    %145 = vmatpush.msra.mxu0 %v136
    %146 = vmatpush.msra.mxu0 %v135
    %147 = vmatpush.msra.mxu0 %v134
    %148 = vmatpush.msra.mxu0 %v133
    %149 = vmatpush.msra.mxu0 %v132
    %150 = vmatpush.msra.mxu0 %v131
    %151 = vmatpush.msra.mxu0 %v130
    %152 = vmatpush.msra.mxu0 %v129
    %153 = vmatpush.msra.mxu0 %v128
    %154 = vmatpush.msra.mxu0 %v127
    %155 = vmatpush.msra.mxu0 %v126
    %156 = vmatpush.msra.mxu0 %v125
    %157 = vmatmul.f32.gmra.mxu0 %v117
    %v158 = vpop.f32.mrf.mxu0
    %v159 = vadd.f32 0.0, %v158
    %160 = vmatmul.f32.gmra.mxu0 %v118
    %v161 = vpop.f32.mrf.mxu0
    %v162 = vadd.f32 0.0, %v161
    %163 = vmatmul.f32.gmra.mxu0 %v119
    %v164 = vpop.f32.mrf.mxu0
    %v165 = vadd.f32 0.0, %v164
    %166 = vmatmul.f32.gmra.mxu0 %v120
    %v167 = vpop.f32.mrf.mxu0
    %v168 = vadd.f32 0.0, %v167
    %169 = vmatmul.f32.gmra.mxu0 %v121
    %v170 = vpop.f32.mrf.mxu0
    %v171 = vadd.f32 0.0, %v170
    %172 = vmatmul.f32.gmra.mxu0 %v122
    %v173 = vpop.f32.mrf.mxu0
    %v174 = vadd.f32 0.0, %v173
    %175 = vmatmul.f32.gmra.mxu0 %v123
    %v176 = vpop.f32.mrf.mxu0
    %v177 = vadd.f32 0.0, %v176
    %178 = vmatmul.f32.gmra.mxu0 %v124
    %v179 = vpop.f32.mrf.mxu0
    %v180 = vadd.f32 0.0, %v179
    %181 = vdwg.mxu0
    %v182 = vld [vmem:[%s2] sm:$0xff]
    %v183 = vld [vmem:[%s2 + $0x8] sm:$0xff]
    %v184 = vld [vmem:[%s2 + $0x10] sm:$0xff]
    %v185 = vld [vmem:[%s2 + $0x18] sm:$0xff]
    %v186 = vld [vmem:[%s2 + $0x20] sm:$0xff]
    %v187 = vld [vmem:[%s2 + $0x28] sm:$0xff]
    %v188 = vld [vmem:[%s2 + $0x30] sm:$0xff]
    %v189 = vld [vmem:[%s2 + $0x38] sm:$0xff]
    %v190 = vld [vmem:[%s4] sm:$0x1]
    %v192 = vperm.slane %v190, 0
    %vm194 = vcmask 523264
    %v196 = vsel %vm194, %v159, 0
    %v199 = vsel %vm194, %v162, 0
    %v202 = vsel %vm194, %v165, 0
    %v205 = vsel %vm194, %v168, 0
    %v208 = vsel %vm194, %v171, 0
    %v211 = vsel %vm194, %v174, 0
    %v214 = vsel %vm194, %v177, 0
    %v217 = vsel %vm194, %v180, 0
    %219 = vmatpush.msra.mxu0 0.0
    %220 = vmatpush.msra.mxu0 0.0
    %221 = vmatpush.msra.mxu0 0.0
    %222 = vmatpush.msra.mxu0 0.0
    %223 = vmatpush.msra.mxu0 0.0
    %224 = vmatpush.msra.mxu0 0.0
    %225 = vmatpush.msra.mxu0 0.0
    %226 = vmatpush.msra.mxu0 0.0
    %227 = vmatpush.msra.mxu0 %v189
    %228 = vmatpush.msra.mxu0 %v188
    %229 = vmatpush.msra.mxu0 %v187
    %230 = vmatpush.msra.mxu0 %v186
    %231 = vmatpush.msra.mxu0 %v185
    %232 = vmatpush.msra.mxu0 %v184
    %233 = vmatpush.msra.mxu0 %v183
    %234 = vmatpush.msra.mxu0 %v182
    %235 = vmatmul.f32.gmra.mxu0 %v196
    %v236 = vpop.f32.mrf.mxu0
    %v237 = vadd.f32 %v192, %v236
    %238 = vmatmul.f32.gmra.mxu0 %v199
    %v239 = vpop.f32.mrf.mxu0
    %v240 = vadd.f32 %v192, %v239
    %241 = vmatmul.f32.gmra.mxu0 %v202
    %v242 = vpop.f32.mrf.mxu0
    %v243 = vadd.f32 %v192, %v242
    %244 = vmatmul.f32.gmra.mxu0 %v205
    %v245 = vpop.f32.mrf.mxu0
    %v246 = vadd.f32 %v192, %v245
    %247 = vmatmul.f32.gmra.mxu0 %v208
    %v248 = vpop.f32.mrf.mxu0
    %v249 = vadd.f32 %v192, %v248
    %250 = vmatmul.f32.gmra.mxu0 %v211
    %v251 = vpop.f32.mrf.mxu0
    %v252 = vadd.f32 %v192, %v251
    %253 = vmatmul.f32.gmra.mxu0 %v214
    %v254 = vpop.f32.mrf.mxu0
    %v255 = vadd.f32 %v192, %v254
    %256 = vmatmul.f32.gmra.mxu0 %v217
    %v257 = vpop.f32.mrf.mxu0
    %v258 = vadd.f32 %v192, %v257
    %259 = vdwg.mxu0
    %260 = vst [vmem:[#allocation2] sm:$0xff] %v237
    %261 = vst [vmem:[#allocation2 + $0x8] sm:$0xff] %v240
    %262 = vst [vmem:[#allocation2 + $0x10] sm:$0xff] %v243
    %263 = vst [vmem:[#allocation2 + $0x18] sm:$0xff] %v246
    %264 = vst [vmem:[#allocation2 + $0x20] sm:$0xff] %v249
    %265 = vst [vmem:[#allocation2 + $0x28] sm:$0xff] %v252
    %266 = vst [vmem:[#allocation2 + $0x30] sm:$0xff] %v255
    %267 = vst [vmem:[#allocation2 + $0x38] sm:$0xff] %v258
    %v268 = vld [vmem:[#allocation6] sm:$0xff]
    %v269 = vld [vmem:[#allocation6 + $0x8] sm:$0xff]
    %v270 = vld [vmem:[#allocation6 + $0x10] sm:$0xff]
    %v271 = vld [vmem:[#allocation6 + $0x18] sm:$0xff]
    %v272 = vld [vmem:[%s7] sm:$0xff]
    %v273 = vld [vmem:[%s8] sm:$0xff]
    %v274 = vld [vmem:[#allocation2] sm:$0xff]
    %vm275 = vcmask 261120
    %v277 = vsel %vm275, %v272, 0
    %279 = vmatpush.msra.mxu0 0.0
    %280 = vmatpush.msra.mxu0 0.0
    %281 = vmatpush.msra.mxu0 0.0
    %282 = vmatpush.msra.mxu0 0.0
    %283 = vmatpush.msra.mxu0 0.0
    %284 = vmatpush.msra.mxu0 0.0
    %285 = vmatpush.msra.mxu0 0.0
    %286 = vmatpush.msra.mxu0 0.0
    %287 = vmatpush.msra.mxu0 0.0
    %288 = vmatpush.msra.mxu0 0.0
    %289 = vmatpush.msra.mxu0 0.0
    %290 = vmatpush.msra.mxu0 0.0
    %291 = vmatpush.msra.mxu0 %v271
    %292 = vmatpush.msra.mxu0 %v270
    %293 = vmatpush.msra.mxu0 %v269
    %294 = vmatpush.msra.mxu0 %v268
    %295 = vmatmul.f32.gmra.mxu0 %v277
    %v296 = vpop.f32.mrf.mxu0
    %v297 = vadd.f32 0.0, %v296
    %298 = vdwg.mxu0
    %v299 = vadd.f32 %v274, %v297
    %v300 = vmul.f32 %v299, 0.5
    %v301 = vtanh.pop %v300
    %v302 = vadd.f32 %v301, 1.0
    %v303 = vmul.f32 %v302, 0.5
    %v304 = vtanh.pop %v299
    %306 = vrot.lane.b32.xlu0 %v273, 32
    %v307 = vpop.permute.xlu0 %306
    %v309 = vmul.f32 %v303, %v307
    %311 = vrot.lane.b32.xlu0 %v304, 64
    %v312 = vpop.permute.xlu0 %311
    %v314 = vmul.f32 %v303, %v312
    %316 = vrot.lane.b32.xlu0 %v314, 32
    %v317 = vpop.permute.xlu0 %316
    %v319 = vadd.f32 %v309, %v317
    %v320 = vtanh.pop %v319
    %322 = vrot.lane.b32.xlu0 %v320, 64
    %v323 = vpop.permute.xlu0 %322
    %v325 = vmul.f32 %v303, %v323
    %327 = vrot.lane.b32.xlu0 %v325, 32
    %v328 = vpop.permute.xlu0 %327
    %330 = vst.msk [vmem:[#allocation3] sm:$0xff] %vm275, %v328
    %s331 = scalar_lea.vmem [#allocation2], 8
    %v332 = vld [vmem:[%s331] sm:$0xff]
    %v333 = vsel %vm275, %v328, 0
    %335 = vmatpush.msra.mxu0 0.0
    %336 = vmatpush.msra.mxu0 0.0
    %337 = vmatpush.msra.mxu0 0.0
    %338 = vmatpush.msra.mxu0 0.0
    %339 = vmatpush.msra.mxu0 0.0
    %340 = vmatpush.msra.mxu0 0.0
    %341 = vmatpush.msra.mxu0 0.0
    %342 = vmatpush.msra.mxu0 0.0
    %343 = vmatpush.msra.mxu0 0.0
    %344 = vmatpush.msra.mxu0 0.0
    %345 = vmatpush.msra.mxu0 0.0
    %346 = vmatpush.msra.mxu0 0.0
    %347 = vmatpush.msra.mxu0 %v271
    %348 = vmatpush.msra.mxu0 %v270
    %349 = vmatpush.msra.mxu0 %v269
    %350 = vmatpush.msra.mxu0 %v268
    %351 = vmatmul.f32.gmra.mxu0 %v333
    %v352 = vpop.f32.mrf.mxu0
    %v353 = vadd.f32 0.0, %v352
    %354 = vdwg.mxu0
    %v355 = vadd.f32 %v332, %v353
    %v356 = vmul.f32 %v355, 0.5
    %v357 = vtanh.pop %v356
    %v358 = vadd.f32 %v357, 1.0
    %v359 = vmul.f32 %v358, 0.5
    %v360 = vtanh.pop %v355
    %v361 = vmul.f32 %v359, %v319
    %363 = vrot.lane.b32.xlu0 %v360, 64
    %v364 = vpop.permute.xlu0 %363
    %v366 = vmul.f32 %v359, %v364
    %368 = vrot.lane.b32.xlu0 %v366, 32
    %v369 = vpop.permute.xlu0 %368
    %v371 = vadd.f32 %v361, %v369
    %v372 = vtanh.pop %v371
    %374 = vrot.lane.b32.xlu0 %v372, 64
    %v375 = vpop.permute.xlu0 %374
    %v377 = vmul.f32 %v359, %v375
    %379 = vrot.lane.b32.xlu0 %v377, 32
    %v380 = vpop.permute.xlu0 %379
    %s382 = scalar_lea.vmem [#allocation3], 8
    %383 = vst.msk [vmem:[%s382] sm:$0xff] %vm275, %v380
    %s384 = scalar_lea.vmem [#allocation2], 16
    %v385 = vld [vmem:[%s384] sm:$0xff]
    %v386 = vsel %vm275, %v380, 0
    %388 = vmatpush.msra.mxu0 0.0
    %389 = vmatpush.msra.mxu0 0.0
    %390 = vmatpush.msra.mxu0 0.0
    %391 = vmatpush.msra.mxu0 0.0
    %392 = vmatpush.msra.mxu0 0.0
    %393 = vmatpush.msra.mxu0 0.0
    %394 = vmatpush.msra.mxu0 0.0
    %395 = vmatpush.msra.mxu0 0.0
    %396 = vmatpush.msra.mxu0 0.0
    %397 = vmatpush.msra.mxu0 0.0
    %398 = vmatpush.msra.mxu0 0.0
    %399 = vmatpush.msra.mxu0 0.0
    %400 = vmatpush.msra.mxu0 %v271
    %401 = vmatpush.msra.mxu0 %v270
    %402 = vmatpush.msra.mxu0 %v269
    %403 = vmatpush.msra.mxu0 %v268
    %404 = vmatmul.f32.gmra.mxu0 %v386
    %v405 = vpop.f32.mrf.mxu0
    %v406 = vadd.f32 0.0, %v405
    %407 = vdwg.mxu0
    %v408 = vadd.f32 %v385, %v406
    %v409 = vmul.f32 %v408, 0.5
    %v410 = vtanh.pop %v409
    %v411 = vadd.f32 %v410, 1.0
    %v412 = vmul.f32 %v411, 0.5
    %v413 = vtanh.pop %v408
    %v414 = vmul.f32 %v412, %v371
    %416 = vrot.lane.b32.xlu0 %v413, 64
    %v417 = vpop.permute.xlu0 %416
    %v419 = vmul.f32 %v412, %v417
    %421 = vrot.lane.b32.xlu0 %v419, 32
    %v422 = vpop.permute.xlu0 %421
    %v424 = vadd.f32 %v414, %v422
    %v425 = vtanh.pop %v424
    %427 = vrot.lane.b32.xlu0 %v425, 64
    %v428 = vpop.permute.xlu0 %427
    %v430 = vmul.f32 %v412, %v428
    %432 = vrot.lane.b32.xlu0 %v430, 32
    %v433 = vpop.permute.xlu0 %432
    %s435 = scalar_lea.vmem [#allocation3], 16
    %436 = vst.msk [vmem:[%s435] sm:$0xff] %vm275, %v433
    %s437 = scalar_lea.vmem [#allocation2], 24
    %v438 = vld [vmem:[%s437] sm:$0xff]
    %v439 = vsel %vm275, %v433, 0
    %441 = vmatpush.msra.mxu0 0.0
    %442 = vmatpush.msra.mxu0 0.0
    %443 = vmatpush.msra.mxu0 0.0
    %444 = vmatpush.msra.mxu0 0.0
    %445 = vmatpush.msra.mxu0 0.0
    %446 = vmatpush.msra.mxu0 0.0
    %447 = vmatpush.msra.mxu0 0.0
    %448 = vmatpush.msra.mxu0 0.0
    %449 = vmatpush.msra.mxu0 0.0
    %450 = vmatpush.msra.mxu0 0.0
    %451 = vmatpush.msra.mxu0 0.0
    %452 = vmatpush.msra.mxu0 0.0
    %453 = vmatpush.msra.mxu0 %v271
    %454 = vmatpush.msra.mxu0 %v270
    %455 = vmatpush.msra.mxu0 %v269
    %456 = vmatpush.msra.mxu0 %v268
    %457 = vmatmul.f32.gmra.mxu0 %v439
    %v458 = vpop.f32.mrf.mxu0
    %v459 = vadd.f32 0.0, %v458
    %460 = vdwg.mxu0
    %v461 = vadd.f32 %v438, %v459
    %v462 = vmul.f32 %v461, 0.5
    %v463 = vtanh.pop %v462
    %v464 = vadd.f32 %v463, 1.0
    %v465 = vmul.f32 %v464, 0.5
    %v466 = vtanh.pop %v461
    %v467 = vmul.f32 %v465, %v424
    %469 = vrot.lane.b32.xlu0 %v466, 64
    %v470 = vpop.permute.xlu0 %469
    %v472 = vmul.f32 %v465, %v470
    %474 = vrot.lane.b32.xlu0 %v472, 32
    %v475 = vpop.permute.xlu0 %474
    %v477 = vadd.f32 %v467, %v475
    %v478 = vtanh.pop %v477
    %480 = vrot.lane.b32.xlu0 %v478, 64
    %v481 = vpop.permute.xlu0 %480
    %v483 = vmul.f32 %v465, %v481
    %485 = vrot.lane.b32.xlu0 %v483, 32
    %v486 = vpop.permute.xlu0 %485
    %s488 = scalar_lea.vmem [#allocation3], 24
    %489 = vst.msk [vmem:[%s488] sm:$0xff] %vm275, %v486
    %s490 = scalar_lea.vmem [#allocation2], 32
    %v491 = vld [vmem:[%s490] sm:$0xff]
    %v492 = vsel %vm275, %v486, 0
    %494 = vmatpush.msra.mxu0 0.0
    %495 = vmatpush.msra.mxu0 0.0
    %496 = vmatpush.msra.mxu0 0.0
    %497 = vmatpush.msra.mxu0 0.0
    %498 = vmatpush.msra.mxu0 0.0
    %499 = vmatpush.msra.mxu0 0.0
    %500 = vmatpush.msra.mxu0 0.0
    %501 = vmatpush.msra.mxu0 0.0
    %502 = vmatpush.msra.mxu0 0.0
    %503 = vmatpush.msra.mxu0 0.0
    %504 = vmatpush.msra.mxu0 0.0
    %505 = vmatpush.msra.mxu0 0.0
    %506 = vmatpush.msra.mxu0 %v271
    %507 = vmatpush.msra.mxu0 %v270
    %508 = vmatpush.msra.mxu0 %v269
    %509 = vmatpush.msra.mxu0 %v268
    %510 = vmatmul.f32.gmra.mxu0 %v492
    %v511 = vpop.f32.mrf.mxu0
    %v512 = vadd.f32 0.0, %v511
    %513 = vdwg.mxu0
    %v514 = vadd.f32 %v491, %v512
    %v515 = vmul.f32 %v514, 0.5
    %v516 = vtanh.pop %v515
    %v517 = vadd.f32 %v516, 1.0
    %v518 = vmul.f32 %v517, 0.5
    %v519 = vtanh.pop %v514
    %v520 = vmul.f32 %v518, %v477
    %522 = vrot.lane.b32.xlu0 %v519, 64
    %v523 = vpop.permute.xlu0 %522
    %v525 = vmul.f32 %v518, %v523
    %527 = vrot.lane.b32.xlu0 %v525, 32
    %v528 = vpop.permute.xlu0 %527
    %v530 = vadd.f32 %v520, %v528
    %v531 = vtanh.pop %v530
    %533 = vrot.lane.b32.xlu0 %v531, 64
    %v534 = vpop.permute.xlu0 %533
    %v536 = vmul.f32 %v518, %v534
    %538 = vrot.lane.b32.xlu0 %v536, 32
    %v539 = vpop.permute.xlu0 %538
    %s541 = scalar_lea.vmem [#allocation3], 32
    %542 = vst.msk [vmem:[%s541] sm:$0xff] %vm275, %v539
    %s543 = scalar_lea.vmem [#allocation2], 40
    %v544 = vld [vmem:[%s543] sm:$0xff]
    %v545 = vsel %vm275, %v539, 0
    %547 = vmatpush.msra.mxu0 0.0
    %548 = vmatpush.msra.mxu0 0.0
    %549 = vmatpush.msra.mxu0 0.0
    %550 = vmatpush.msra.mxu0 0.0
    %551 = vmatpush.msra.mxu0 0.0
    %552 = vmatpush.msra.mxu0 0.0
    %553 = vmatpush.msra.mxu0 0.0
    %554 = vmatpush.msra.mxu0 0.0
    %555 = vmatpush.msra.mxu0 0.0
    %556 = vmatpush.msra.mxu0 0.0
    %557 = vmatpush.msra.mxu0 0.0
    %558 = vmatpush.msra.mxu0 0.0
    %559 = vmatpush.msra.mxu0 %v271
    %560 = vmatpush.msra.mxu0 %v270
    %561 = vmatpush.msra.mxu0 %v269
    %562 = vmatpush.msra.mxu0 %v268
    %563 = vmatmul.f32.gmra.mxu0 %v545
    %v564 = vpop.f32.mrf.mxu0
    %v565 = vadd.f32 0.0, %v564
    %566 = vdwg.mxu0
    %v567 = vadd.f32 %v544, %v565
    %v568 = vmul.f32 %v567, 0.5
    %v569 = vtanh.pop %v568
    %v570 = vadd.f32 %v569, 1.0
    %v571 = vmul.f32 %v570, 0.5
    %v572 = vtanh.pop %v567
    %v573 = vmul.f32 %v571, %v530
    %575 = vrot.lane.b32.xlu0 %v572, 64
    %v576 = vpop.permute.xlu0 %575
    %v578 = vmul.f32 %v571, %v576
    %580 = vrot.lane.b32.xlu0 %v578, 32
    %v581 = vpop.permute.xlu0 %580
    %v583 = vadd.f32 %v573, %v581
    %v584 = vtanh.pop %v583
    %586 = vrot.lane.b32.xlu0 %v584, 64
    %v587 = vpop.permute.xlu0 %586
    %v589 = vmul.f32 %v571, %v587
    %591 = vrot.lane.b32.xlu0 %v589, 32
    %v592 = vpop.permute.xlu0 %591
    %s594 = scalar_lea.vmem [#allocation3], 40
    %595 = vst.msk [vmem:[%s594] sm:$0xff] %vm275, %v592
    %s596 = scalar_lea.vmem [#allocation2], 48
    %v597 = vld [vmem:[%s596] sm:$0xff]
    %v598 = vsel %vm275, %v592, 0
    %600 = vmatpush.msra.mxu0 0.0
    %601 = vmatpush.msra.mxu0 0.0
    %602 = vmatpush.msra.mxu0 0.0
    %603 = vmatpush.msra.mxu0 0.0
    %604 = vmatpush.msra.mxu0 0.0
    %605 = vmatpush.msra.mxu0 0.0
    %606 = vmatpush.msra.mxu0 0.0
    %607 = vmatpush.msra.mxu0 0.0
    %608 = vmatpush.msra.mxu0 0.0
    %609 = vmatpush.msra.mxu0 0.0
    %610 = vmatpush.msra.mxu0 0.0
    %611 = vmatpush.msra.mxu0 0.0
    %612 = vmatpush.msra.mxu0 %v271
    %613 = vmatpush.msra.mxu0 %v270
    %614 = vmatpush.msra.mxu0 %v269
    %615 = vmatpush.msra.mxu0 %v268
    %616 = vmatmul.f32.gmra.mxu0 %v598
    %v617 = vpop.f32.mrf.mxu0
    %v618 = vadd.f32 0.0, %v617
    %619 = vdwg.mxu0
    %v620 = vadd.f32 %v597, %v618
    %v621 = vmul.f32 %v620, 0.5
    %v622 = vtanh.pop %v621
    %v623 = vadd.f32 %v622, 1.0
    %v624 = vmul.f32 %v623, 0.5
    %v625 = vtanh.pop %v620
    %v626 = vmul.f32 %v624, %v583
    %628 = vrot.lane.b32.xlu0 %v625, 64
    %v629 = vpop.permute.xlu0 %628
    %v631 = vmul.f32 %v624, %v629
    %633 = vrot.lane.b32.xlu0 %v631, 32
    %v634 = vpop.permute.xlu0 %633
    %v636 = vadd.f32 %v626, %v634
    %v637 = vtanh.pop %v636
    %639 = vrot.lane.b32.xlu0 %v637, 64
    %v640 = vpop.permute.xlu0 %639
    %v642 = vmul.f32 %v624, %v640
    %644 = vrot.lane.b32.xlu0 %v642, 32
    %v645 = vpop.permute.xlu0 %644
    %s647 = scalar_lea.vmem [#allocation3], 48
    %648 = vst.msk [vmem:[%s647] sm:$0xff] %vm275, %v645
    %s649 = scalar_lea.vmem [#allocation2], 56
    %v650 = vld [vmem:[%s649] sm:$0xff]
    %v651 = vsel %vm275, %v645, 0
    %653 = vmatpush.msra.mxu0 0.0
    %654 = vmatpush.msra.mxu0 0.0
    %655 = vmatpush.msra.mxu0 0.0
    %656 = vmatpush.msra.mxu0 0.0
    %657 = vmatpush.msra.mxu0 0.0
    %658 = vmatpush.msra.mxu0 0.0
    %659 = vmatpush.msra.mxu0 0.0
    %660 = vmatpush.msra.mxu0 0.0
    %661 = vmatpush.msra.mxu0 0.0
    %662 = vmatpush.msra.mxu0 0.0
    %663 = vmatpush.msra.mxu0 0.0
    %664 = vmatpush.msra.mxu0 0.0
    %665 = vmatpush.msra.mxu0 %v271
    %666 = vmatpush.msra.mxu0 %v270
    %667 = vmatpush.msra.mxu0 %v269
    %668 = vmatpush.msra.mxu0 %v268
    %669 = vmatmul.f32.gmra.mxu0 %v651
    %v670 = vpop.f32.mrf.mxu0
    %v671 = vadd.f32 0.0, %v670
    %672 = vdwg.mxu0
    %v673 = vadd.f32 %v650, %v671
    %v674 = vmul.f32 %v673, 0.5
    %v675 = vtanh.pop %v674
    %v676 = vadd.f32 %v675, 1.0
    %v677 = vmul.f32 %v676, 0.5
    %v678 = vtanh.pop %v673
    %v679 = vmul.f32 %v677, %v636
    %681 = vrot.lane.b32.xlu0 %v678, 64
    %v682 = vpop.permute.xlu0 %681
    %v684 = vmul.f32 %v677, %v682
    %686 = vrot.lane.b32.xlu0 %v684, 32
    %v687 = vpop.permute.xlu0 %686
    %v689 = vadd.f32 %v679, %v687
    %v690 = vtanh.pop %v689
    %692 = vrot.lane.b32.xlu0 %v690, 64
    %v693 = vpop.permute.xlu0 %692
    %v695 = vmul.f32 %v677, %v693
    %697 = vrot.lane.b32.xlu0 %v695, 32
    %v698 = vpop.permute.xlu0 %697
    %s700 = scalar_lea.vmem [#allocation3], 56
    %701 = vst.msk [vmem:[%s700] sm:$0xff] %vm275, %v698
    %702 = vst.msk [vmem:[%s10] sm:$0xff] %vm275, %v698
    %704 = vrot.lane.b32.xlu0 %v689, 96
    %v705 = vpop.permute.xlu0 %704
    %707 = vst.msk [vmem:[%s11] sm:$0xff] %vm275, %v705
    %v708 = vld [vmem:[#allocation3] sm:$0xff]
    %v709 = vld [vmem:[#allocation3 + $0x8] sm:$0xff]
    %v710 = vld [vmem:[#allocation3 + $0x10] sm:$0xff]
    %v711 = vld [vmem:[#allocation3 + $0x18] sm:$0xff]
    %v712 = vld [vmem:[#allocation3 + $0x20] sm:$0xff]
    %v713 = vld [vmem:[#allocation3 + $0x28] sm:$0xff]
    %v714 = vld [vmem:[#allocation3 + $0x30] sm:$0xff]
    %v715 = vld [vmem:[#allocation3 + $0x38] sm:$0xff]
    %v716 = vld [vmem:[%s5] sm:$0xff]
    %v717 = vld [vmem:[%s5 + $0x8] sm:$0xff]
    %v718 = vld [vmem:[%s5 + $0x10] sm:$0xff]
    %v719 = vld [vmem:[%s5 + $0x18] sm:$0xff]
    %v720 = vld [vmem:[%s6] sm:$0x1]
    %v722 = vperm.slane %v720, 0
    %v725 = vsel %vm275, %v708, 0
    %v728 = vsel %vm275, %v709, 0
    %v731 = vsel %vm275, %v710, 0
    %v734 = vsel %vm275, %v711, 0
    %v737 = vsel %vm275, %v712, 0
    %v740 = vsel %vm275, %v713, 0
    %v743 = vsel %vm275, %v714, 0
    %v746 = vsel %vm275, %v715, 0
    %748 = vmatpush.msra.mxu0 0.0
    %749 = vmatpush.msra.mxu0 0.0
    %750 = vmatpush.msra.mxu0 0.0
    %751 = vmatpush.msra.mxu0 0.0
    %752 = vmatpush.msra.mxu0 0.0
    %753 = vmatpush.msra.mxu0 0.0
    %754 = vmatpush.msra.mxu0 0.0
    %755 = vmatpush.msra.mxu0 0.0
    %756 = vmatpush.msra.mxu0 0.0
    %757 = vmatpush.msra.mxu0 0.0
    %758 = vmatpush.msra.mxu0 0.0
    %759 = vmatpush.msra.mxu0 0.0
    %760 = vmatpush.msra.mxu0 %v719
    %761 = vmatpush.msra.mxu0 %v718
    %762 = vmatpush.msra.mxu0 %v717
    %763 = vmatpush.msra.mxu0 %v716
    %764 = vmatmul.f32.gmra.mxu0 %v725
    %v765 = vpop.f32.mrf.mxu0
    %v766 = vadd.f32 %v722, %v765
    %767 = vmatmul.f32.gmra.mxu0 %v728
    %v768 = vpop.f32.mrf.mxu0
    %v769 = vadd.f32 %v722, %v768
    %770 = vmatmul.f32.gmra.mxu0 %v731
    %v771 = vpop.f32.mrf.mxu0
    %v772 = vadd.f32 %v722, %v771
    %773 = vmatmul.f32.gmra.mxu0 %v734
    %v774 = vpop.f32.mrf.mxu0
    %v775 = vadd.f32 %v722, %v774
    %776 = vmatmul.f32.gmra.mxu0 %v737
    %v777 = vpop.f32.mrf.mxu0
    %v778 = vadd.f32 %v722, %v777
    %779 = vmatmul.f32.gmra.mxu0 %v740
    %v780 = vpop.f32.mrf.mxu0
    %v781 = vadd.f32 %v722, %v780
    %782 = vmatmul.f32.gmra.mxu0 %v743
    %v783 = vpop.f32.mrf.mxu0
    %v784 = vadd.f32 %v722, %v783
    %785 = vmatmul.f32.gmra.mxu0 %v746
    %v786 = vpop.f32.mrf.mxu0
    %v787 = vadd.f32 %v722, %v786
    %788 = vdwg.mxu0
    %789 = vst [vmem:[%s9] sm:$0xff] %v766
    %790 = vst [vmem:[%s9 + $0x8] sm:$0xff] %v769
    %791 = vst [vmem:[%s9 + $0x10] sm:$0xff] %v772
    %792 = vst [vmem:[%s9 + $0x18] sm:$0xff] %v775
    %793 = vst [vmem:[%s9 + $0x20] sm:$0xff] %v778
    %794 = vst [vmem:[%s9 + $0x28] sm:$0xff] %v781
    %795 = vst [vmem:[%s9 + $0x30] sm:$0xff] %v784
    %796 = vst [vmem:[%s9 + $0x38] sm:$0xff] %v787
    // Predicated region
    $region46: #{char_decoder_forward.1} parent=1 // pred_check
      _
    $region47: #{char_decoder_forward.1} parent=1 // pred_check_branch
      %798 = sbr.rel (0) target = $region49
    $region48: #{char_decoder_forward.1} parent=1 // pred_region
      _
    $region49: #{char_decoder_forward.1} parent=1 // pred_fallthru
      _
    // Predicated region
    $region50: #{char_decoder_forward.1} parent=1 // pred_check
      _
    $region51: #{char_decoder_forward.1} parent=1 // pred_check_branch
      %800 = sbr.rel (0) target = $region53
    $region52: #{char_decoder_forward.1} parent=1 // pred_region
      _
    $region53: #{char_decoder_forward.1} parent=1 // pred_fallthru
      _
    // Predicated region
    $region54: #{char_decoder_forward.1} parent=1 // pred_check
      _
    $region55: #{char_decoder_forward.1} parent=1 // pred_check_branch
      %802 = sbr.rel (0) target = $region57
    $region56: #{char_decoder_forward.1} parent=1 // pred_region
      _
    $region57: #{char_decoder_forward.1} parent=1 // pred_fallthru
      _
    // Predicated region
    $region58: #{char_decoder_forward.1} parent=1 // pred_check
      _
    $region59: #{char_decoder_forward.1} parent=1 // pred_check_branch
      %804 = sbr.rel (0) target = $region61
    $region60: #{char_decoder_forward.1} parent=1 // pred_region
      _
    $region61: #{char_decoder_forward.1} parent=1 // pred_fallthru
      _
    // Predicated region
    $region62: #{char_decoder_forward.1} parent=1 // pred_check
      _
    $region63: #{char_decoder_forward.1} parent=1 // pred_check_branch
      %806 = sbr.rel (0) target = $region65
    $region64: #{char_decoder_forward.1} parent=1 // pred_region
      _
    $region65: #{char_decoder_forward.1} parent=1 // pred_fallthru
      _
    // Predicated region
    $region66: #{char_decoder_forward.1} parent=1 // pred_check
      _
    $region67: #{char_decoder_forward.1} parent=1 // pred_check_branch
      %808 = sbr.rel (0) target = $region69
    $region68: #{char_decoder_forward.1} parent=1 // pred_region
      _
    $region69: #{char_decoder_forward.1} parent=1 // pred_fallthru
      _
    %809 = vsyncpa [#allocation5], 1
    %810 = vsyncpa [#allocation7], 1

</llo_original>
